<compile_context>
chip_gen: v7x
topology: tpu7x:2x2x1
jax: 0.10.0
libtpu: 0.0.40
codegen_flags: <defaults>
</compile_context>

<pallas_src>
import jax
import jax.numpy as jnp
from jax.experimental import pallas as pl
from jax.experimental.pallas import tpu as pltpu

HIDDEN = 128
_LANE = 128
_SUBLANE = 8


def _round_up(x, m):
    return ((x + m - 1) // m) * m


def _cdiv(a, b):
    return (a + b - 1) // b


def _vmem_capacity_bytes():
    # Trace-time hardware query; conservative fallback = v7x per-core VMEM.
    try:
        info = pltpu.get_tpu_info()
        cap = getattr(info, "vmem_capacity_bytes", None)
        if cap:
            return int(cap)
    except Exception:
        pass
    return 64 << 20


def _mlp_kernel(x_ref, w1_ref, b1_ref, w2_ref, b2_ref, o_ref):
    # Layer 1 on the MXU: (TB, D) @ (D, 128) -> (TB, 128).
    # bf16 operands keep the MXU single-pass on every generation; f32 accumulation.
    h = jnp.dot(
        x_ref[...].astype(jnp.bfloat16),
        w1_ref[...],                      # already bf16 (cast once in wrapper)
        preferred_element_type=jnp.float32,
    )
    h = jnp.maximum(h + b1_ref[...], 0.0)

    # Layer 2 as an NT matmul so the result lands lane-dense:
    #   (8, 128) x (TB, 128)^T -> (8, TB); only row 0 holds the real W2.
    # Contracting h's minor dim keeps h in its natural layout (no per-tile transpose).
    y = jax.lax.dot_general(
        w2_ref[...],                      # bf16, zero-padded to 8 rows
        h.astype(jnp.bfloat16),
        dimension_numbers=(((1,), (1,)), ((), ())),
        preferred_element_type=jnp.float32,
    )
    y = jnp.maximum(y[0:1, :] + b2_ref[0], 0.0)   # (1, TB), lane-dense
    o_ref[...] = y.astype(o_ref.dtype)


@jax.jit
def mlp_regression(x, w1, b1, w2, b2):
    """x: [B, D] f32; w1: [D,128] f32; b1: [1,128] f32; w2: [1,128] f32; b2: [1] f32 -> [B,1] f32."""
    B, D = x.shape

    # ---- batch-tile sizing from a per-generation VMEM budget ----------------
    vmem_cap = _vmem_capacity_bytes()           # ~128 MiB v5e/v6e, 64 MiB v7x
    budget = min(vmem_cap // 2, 40 << 20)       # bytes available for tiles

    d_lane = _round_up(D, _LANE)                # (TB, D) VMEM tiles are lane-padded
    fixed = (_round_up(D, _SUBLANE) * HIDDEN * 2 * 2   # W1 bf16 (double-buffered)
             + 8 * HIDDEN * 2 * 2                      # W2 (padded) bf16
             + HIDDEN * 4 * 2)                         # b1 f32
    per_row = (2 * d_lane * 4        # x tile, f32, double-buffered, lane-padded
               + HIDDEN * 4          # h (f32)
               + HIDDEN * 2          # h (bf16 copy for layer 2)
               + 2 * 4)              # output slab, double-buffered
    tb_budget = max((budget - fixed) // per_row, _LANE)
    tb_budget = (tb_budget // _LANE) * _LANE

    # Batch handling: pad tiny batches up to one lane-dense tile (negligible
    # copy); otherwise rely on Pallas ragged last-block handling — no
    # full-array jnp.pad copy of x in HBM.
    B_pad = max(B, _LANE)
    if B_pad != B:
        x = jnp.pad(x, ((0, B_pad - B), (0, 0)))

    # Keep >=2 grid steps when the batch allows so v7x's two TensorCores are
    # both busy; the extra step is ~0.35us overhead on single-core chips.
    tb_full = _round_up(B_pad, _LANE)
    tb_mega = _round_up(_cdiv(B_pad, 2), _LANE)
    TB = max(_LANE, min(tb_budget, tb_full, tb_mega))
    grid = (_cdiv(B_pad, TB),)

    # Scoped-VMEM limit from actual usage + headroom, never above physical
    # capacity (v7x: 64 MiB). Covers v5e's 16 MiB default scoped limit.
    vmem_needed = fixed + TB * per_row
    vmem_limit = max(vmem_needed + vmem_needed // 4 + (4 << 20), 16 << 20)
    vmem_limit = int(min(vmem_limit, vmem_cap - (8 << 20)))

    # Weights: cast resident W1/W2 to bf16 once; pad W2 (1,128)->(8,128) so the
    # second matmul's M sits on a sublane tile (extra rows are zeros, discarded).
    w1_bf = w1.astype(jnp.bfloat16)
    w2_pad = jnp.pad(w2, ((0, 8 - w2.shape[0]), (0, 0))).astype(jnp.bfloat16)

    out = pl.pallas_call(
        _mlp_kernel,
        out_shape=jax.ShapeDtypeStruct((1, B_pad), jnp.float32),
        grid=grid,
        in_specs=[
            pl.BlockSpec((TB, D), lambda i: (i, 0)),            # x: tiled over batch
            pl.BlockSpec((D, HIDDEN), lambda i: (0, 0)),        # W1: resident
            pl.BlockSpec((1, HIDDEN), lambda i: (0, 0)),        # b1: resident
            pl.BlockSpec((8, HIDDEN), lambda i: (0, 0)),        # W2 (padded): resident
            pl.BlockSpec(memory_space=pltpu.MemorySpace.SMEM),  # b2: SMEM scalar
        ],
        out_specs=pl.BlockSpec((1, TB), lambda i: (0, i)),      # lane-dense output slab
        compiler_params=pltpu.CompilerParams(
            dimension_semantics=("parallel",),                  # independent batch tiles
            vmem_limit_bytes=vmem_limit,
        ),
    )(x, w1_bf, b1, w2_pad, b2)

    return out[0, :B].reshape(B, 1)


def init_params(key, input_dim):
    # Deterministic init mimicking PyTorch nn.Linear defaults:
    # U(-1/sqrt(fan_in), 1/sqrt(fan_in)) for weights and biases.
    k1, k2, k3, k4 = jax.random.split(key, 4)
    bound1 = 1.0 / jnp.sqrt(jnp.float32(input_dim))
    w1 = jax.random.uniform(k1, (input_dim, HIDDEN), jnp.float32, -bound1, bound1)
    b1 = jax.random.uniform(k2, (1, HIDDEN), jnp.float32, -bound1, bound1)
    bound2 = 1.0 / jnp.sqrt(jnp.float32(HIDDEN))
    w2 = jax.random.uniform(k3, (1, HIDDEN), jnp.float32, -bound2, bound2)  # PyTorch layout
    b2 = jax.random.uniform(k4, (1,), jnp.float32, -bound2, bound2)
    return w1, b1, w2, b2


if __name__ == "__main__":
    key = jax.random.PRNGKey(0)
    kx, kp = jax.random.split(key)

    batch, input_dim = 8, 16  # small shapes consistent with the module
    x = jax.random.normal(kx, (batch, input_dim), dtype=jnp.float32)
    w1, b1, w2, b2 = init_params(kp, input_dim)

    out = jax.block_until_ready(mlp_regression(x, w1, b1, w2, b2))

    # Reference in plain JAX (PyTorch semantics: relu(relu(x W1^T + b1) W2^T + b2)).
    ref = jnp.maximum(jnp.maximum(x @ w1 + b1, 0.0) @ w2.T + b2, 0.0)
    assert out.shape == (batch, 1)
    # bf16 MXU operands (f32 accumulation) -> ~3 significant digits.
    assert jnp.allclose(out, ref, atol=2e-2, rtol=2e-2), (out, ref)

    # Batch that is >=128 and not a multiple of the tile: exercises the ragged
    # last-block path (no jnp.pad of x) and the 2-grid-step megacore split.
    x2 = jax.random.normal(kx, (300, input_dim), dtype=jnp.float32)
    out2 = jax.block_until_ready(mlp_regression(x2, w1, b1, w2, b2))
    ref2 = jnp.maximum(jnp.maximum(x2 @ w1 + b1, 0.0) @ w2.T + b2, 0.0)
    assert out2.shape == (300, 1)
    assert jnp.allclose(out2, ref2, atol=2e-2, rtol=2e-2)

    print("KERNEL_OK")
</pallas_src>

<mosaic_0001>
module attributes {stable_mosaic.version = 11 : i64} {
  func.func @_mlp_kernel(%arg0: i32, %arg1: memref<128x16xf32, #tpu.memory_space<vmem>>, %arg2: memref<16x128xbf16, #tpu.memory_space<vmem>>, %arg3: memref<1x128xf32, #tpu.memory_space<vmem>>, %arg4: memref<8x128xbf16, #tpu.memory_space<vmem>>, %arg5: memref<1xf32, #tpu.memory_space<smem>>, %arg6: memref<1x128xf32, #tpu.memory_space<vmem>>) attributes {dimension_semantics = [#tpu.dimension_semantics<parallel>], iteration_bounds = array<i64: 1>, scalar_prefetch = 0 : i64, scratch_operands = 0 : i64, tpu.core_type = #tpu.core_type<tc>, window_params = [{transform_indices = @transform_0, window_bounds = array<i64: 128, 16>}, {pipeline_mode = #tpu.pipeline_mode<synchronous>, transform_indices = @transform_1, window_bounds = array<i64: 16, 128>}, {pipeline_mode = #tpu.pipeline_mode<synchronous>, transform_indices = @transform_2, window_bounds = array<i64: 1, 128>}, {pipeline_mode = #tpu.pipeline_mode<synchronous>, transform_indices = @transform_3, window_bounds = array<i64: 8, 128>}, {transform_indices = @transform_4, window_bounds = array<i64: 1>}, {transform_indices = @transform_5, window_bounds = array<i64: 1, 128>}]} {
    %c0 = arith.constant 0 : index
    %c0_0 = arith.constant 0 : index
    %0 = vector.load %arg1[%c0, %c0_0] : memref<128x16xf32, #tpu.memory_space<vmem>>, vector<128x16xf32>
    %1 = arith.truncf %0 : vector<128x16xf32> to vector<128x16xbf16>
    %c0_1 = arith.constant 0 : index
    %c0_2 = arith.constant 0 : index
    %2 = vector.load %arg2[%c0_1, %c0_2] : memref<16x128xbf16, #tpu.memory_space<vmem>>, vector<16x128xbf16>
    %cst = arith.constant dense<0.000000e+00> : vector<128x128xf32>
    %3 = tpu.matmul %1, %2, %cst {dimension_numbers = #tpu.dot_dimension_numbers<[1], [0], [0], [1], [0, 0, 1, 1], [], []>} : vector<128x16xbf16>, vector<16x128xbf16>, vector<128x128xf32> -> vector<128x128xf32>
    %c0_3 = arith.constant 0 : index
    %c0_4 = arith.constant 0 : index
    %4 = vector.load %arg3[%c0_3, %c0_4] : memref<1x128xf32, #tpu.memory_space<vmem>>, vector<1x128xf32>
    %5 = vector.broadcast %4 : vector<1x128xf32> to vector<128x128xf32>
    %6 = arith.addf %3, %5 : vector<128x128xf32>
    %cst_5 = arith.constant 0.000000e+00 : f32
    %7 = vector.broadcast %cst_5 : f32 to vector<128x128xf32>
    %8 = arith.maximumf %6, %7 : vector<128x128xf32>
    %c0_6 = arith.constant 0 : index
    %c0_7 = arith.constant 0 : index
    %9 = vector.load %arg4[%c0_6, %c0_7] : memref<8x128xbf16, #tpu.memory_space<vmem>>, vector<8x128xbf16>
    %10 = arith.truncf %8 : vector<128x128xf32> to vector<128x128xbf16>
    %cst_8 = arith.constant dense<0.000000e+00> : vector<8x128xf32>
    %11 = tpu.matmul %9, %10, %cst_8 {dimension_numbers = #tpu.dot_dimension_numbers<[1], [1], [0], [0], [0, 0, 1, 0], [], []>} : vector<8x128xbf16>, vector<128x128xbf16>, vector<8x128xf32> -> vector<8x128xf32>
    %12 = vector.extract_strided_slice %11 {offsets = [0, 0], sizes = [1, 128], strides = [1, 1]} : vector<8x128xf32> to vector<1x128xf32>
    %c0_9 = arith.constant 0 : index
    %13 = memref.load %arg5[%c0_9] : memref<1xf32, #tpu.memory_space<smem>>
    %14 = vector.broadcast %13 : f32 to vector<1x128xf32>
    %15 = arith.addf %12, %14 : vector<1x128xf32>
    %cst_10 = arith.constant 0.000000e+00 : f32
    %16 = vector.broadcast %cst_10 : f32 to vector<1x128xf32>
    %17 = arith.maximumf %15, %16 : vector<1x128xf32>
    %c0_11 = arith.constant 0 : index
    %c0_12 = arith.constant 0 : index
    %18 = vector.load %arg6[%c0_11, %c0_12] : memref<1x128xf32, #tpu.memory_space<vmem>>, vector<1x128xf32>
    tpu.vector_store %arg6[%c0_11, %c0_12], %17 {strides = array<i32>} : memref<1x128xf32, #tpu.memory_space<vmem>>, vector<1x128xf32>,
    return
  }
  func.func @transform_0(%arg0: i32) -> (i32, i32) {
    %c0_i32 = arith.constant 0 : i32
    %c0_i32_0 = arith.constant 0 : i32
    return %arg0, %c0_i32 : i32, i32
  }
  func.func @transform_1(%arg0: i32) -> (i32, i32) {
    %c0_i32 = arith.constant 0 : i32
    %c0_i32_0 = arith.constant 0 : i32
    %c0_i32_1 = arith.constant 0 : i32
    return %c0_i32, %c0_i32_0 : i32, i32
  }
  func.func @transform_2(%arg0: i32) -> (i32, i32) {
    %c0_i32 = arith.constant 0 : i32
    %c0_i32_0 = arith.constant 0 : i32
    %c0_i32_1 = arith.constant 0 : i32
    return %c0_i32, %c0_i32_0 : i32, i32
  }
  func.func @transform_3(%arg0: i32) -> (i32, i32) {
    %c0_i32 = arith.constant 0 : i32
    %c0_i32_0 = arith.constant 0 : i32
    %c0_i32_1 = arith.constant 0 : i32
    return %c0_i32, %c0_i32_0 : i32, i32
  }
  func.func @transform_4(%arg0: i32) -> i32 {
    %c0_i32 = arith.constant 0 : i32
    %c0_i32_0 = arith.constant 0 : i32
    return %c0_i32 : i32
  }
  func.func @transform_5(%arg0: i32) -> (i32, i32) {
    %c0_i32 = arith.constant 0 : i32
    %c0_i32_0 = arith.constant 0 : i32
    return %c0_i32, %arg0 : i32, i32
  }
}

</mosaic_0001>

<llo_original>
// kernel: mlp_regression.1
$region0: #{mlp_regression.1}
  #allocation0 [shape = 'u32[]', space=smem, size = 0x4, offset = 0x4, fixed_abs, tag = 'smem constant byte address 0x4 - core index']
  #allocation1 [shape = 'u32[144,128]{1,0:T(1,128)}', space=vmem, size = 0x12000, scoped, tag = 'internal scratch']
  #allocation2 [shape = 'f32[1]{0:T(128)S(6)}', space=smem, size = 0x200, scoped, tag = 'scoped memory for mlp_regression.1']
  %s0 = inlined_call_operand.vmem [shape: f32[128,16], index: 0, kind: input, shape index: {}]
  %s1 = inlined_call_operand.vmem [shape: bf16[16,128], index: 1, kind: input, shape index: {}]
  %s2 = inlined_call_operand.vmem [shape: f32[1,128], index: 2, kind: input, shape index: {}]
  %s3 = inlined_call_operand.vmem [shape: bf16[8,128], index: 3, kind: input, shape index: {}]
  %s4 = inlined_call_operand.<no memory space> [shape: f32[1], index: 4, kind: input, shape index: {}]
  %s5 = inlined_call_operand.vmem [shape: f32[1,128], index: 5, kind: output, shape index: {}]
  %s6 = sld [smem:[#allocation0]]
  $region30: #{mlp_regression.1} parent=0
    _
  %s8 = ssub.s32 1, %s6
  %s9 = scalar_select 0, %s8, %s6
  %10 = sst [smem:[#allocation2]] %s4
  // Predicated region
  $region2: #{mlp_regression.1} parent=0 // pred_check
    _
  $region3: #{mlp_regression.1} parent=0 // pred_check_branch
    %12 = sbr.rel (0) target = $region5
  $region4: #{mlp_regression.1} parent=0 // pred_region
    _
  $region5: #{mlp_regression.1} parent=0 // pred_fallthru
    _
  // Predicated region
  $region6: #{mlp_regression.1} parent=0 // pred_check
    _
  $region7: #{mlp_regression.1} parent=0 // pred_check_branch
    %14 = sbr.rel (0) target = $region9
  $region8: #{mlp_regression.1} parent=0 // pred_region
    _
  $region9: #{mlp_regression.1} parent=0 // pred_fallthru
    _
  // Predicated region
  $region10: #{mlp_regression.1} parent=0 // pred_check
    _
  $region11: #{mlp_regression.1} parent=0 // pred_check_branch
    %16 = sbr.rel (0) target = $region13
  $region12: #{mlp_regression.1} parent=0 // pred_region
    _
  $region13: #{mlp_regression.1} parent=0 // pred_fallthru
    _
  // Predicated region
  $region14: #{mlp_regression.1} parent=0 // pred_check
    _
  $region15: #{mlp_regression.1} parent=0 // pred_check_branch
    %18 = sbr.rel (0) target = $region17
  $region16: #{mlp_regression.1} parent=0 // pred_region
    _
  $region17: #{mlp_regression.1} parent=0 // pred_fallthru
    _
  // Predicated region
  $region18: #{mlp_regression.1} parent=0 // pred_check
    _
  $region19: #{mlp_regression.1} parent=0 // pred_check_branch
    %20 = sbr.rel (0) target = $region21
  $region20: #{mlp_regression.1} parent=0 // pred_region
    _
  $region21: #{mlp_regression.1} parent=0 // pred_fallthru
    _
  %v22 = vld [vmem:[%s0] sm:$0xff]
  %v23 = vld [vmem:[%s0 + $0x8] sm:$0xff]
  %v24 = vld [vmem:[%s0 + $0x10] sm:$0xff]
  %v25 = vld [vmem:[%s0 + $0x18] sm:$0xff]
  %v26 = vld [vmem:[%s0 + $0x20] sm:$0xff]
  %v27 = vld [vmem:[%s0 + $0x28] sm:$0xff]
  %v28 = vld [vmem:[%s0 + $0x30] sm:$0xff]
  %v29 = vld [vmem:[%s0 + $0x38] sm:$0xff]
  %v30 = vld [vmem:[%s0 + $0x40] sm:$0xff]
  %v31 = vld [vmem:[%s0 + $0x48] sm:$0xff]
  %v32 = vld [vmem:[%s0 + $0x50] sm:$0xff]
  %v33 = vld [vmem:[%s0 + $0x58] sm:$0xff]
  %v34 = vld [vmem:[%s0 + $0x60] sm:$0xff]
  %v35 = vld [vmem:[%s0 + $0x68] sm:$0xff]
  %v36 = vld [vmem:[%s0 + $0x70] sm:$0xff]
  %v37 = vld [vmem:[%s0 + $0x78] sm:$0xff]
  %v38 = vpack.c.bf16 %v23, %v22
  %v39 = vpack.c.bf16 %v25, %v24
  %v40 = vpack.c.bf16 %v27, %v26
  %v41 = vpack.c.bf16 %v29, %v28
  %v42 = vpack.c.bf16 %v31, %v30
  %v43 = vpack.c.bf16 %v33, %v32
  %v44 = vpack.c.bf16 %v35, %v34
  %v45 = vpack.c.bf16 %v37, %v36
  %v46 = vld [vmem:[%s1] sm:$0xf]
  %v47 = vld [vmem:[%s1 + $0x4] sm:$0xf]
  %v48 = vld [vmem:[%s2] sm:$0x1]
  %v50 = vlaneseq
  %v51 = vshrl.u32 %v50, 7
  %v52 = vsub.s32 0, %v51
  %v53 = vrot.slane %v48, %v52
  %v57 = vunpack.c.l.b16 %v46
  %v58 = vunpack.c.l.b16 %v47
  %v59 = vpack.c.b16 %v58, %v57
  %vm61 = vcmask 130048
  %v63 = vsel %vm61, %v38, 0
  %v66 = vsel %vm61, %v39, 0
  %v69 = vsel %vm61, %v40, 0
  %v72 = vsel %vm61, %v41, 0
  %v75 = vsel %vm61, %v42, 0
  %v78 = vsel %vm61, %v43, 0
  %v81 = vsel %vm61, %v44, 0
  %v84 = vsel %vm61, %v45, 0
  %86 = vmatprep.subr.bf16.mxu0 0
  %87 = vmatpush1.bf16.msra.mxu0 %v59
  %88 = vmatprep.subr.bf16.mxu0 0
  %89 = vmatpush1.bf16.msra.mxu0 0
  %90 = vmatprep.subr.bf16.mxu0 0
  %91 = vmatpush1.bf16.msra.mxu0 0
  %92 = vmatprep.subr.bf16.mxu0 0
  %93 = vmatpush1.bf16.msra.mxu0 0
  %94 = vmatprep.subr.bf16.mxu0 0
  %95 = vmatpush1.bf16.msra.mxu0 0
  %96 = vmatprep.subr.bf16.mxu0 0
  %97 = vmatpush1.bf16.msra.mxu0 0
  %98 = vmatprep.subr.bf16.mxu0 0
  %99 = vmatpush1.bf16.msra.mxu0 0
  %100 = vmatprep.subr.bf16.mxu0 0
  %101 = vmatpush1.bf16.msra.mxu0 0
  %102 = vmatprep.subr.bf16.mxu0 0
  %103 = vmatpush1.bf16.msra.mxu0 0
  %104 = vmatprep.subr.bf16.mxu0 0
  %105 = vmatpush1.bf16.msra.mxu0 0
  %106 = vmatprep.subr.bf16.mxu0 0
  %107 = vmatpush1.bf16.msra.mxu0 0
  %108 = vmatprep.subr.bf16.mxu0 0
  %109 = vmatpush1.bf16.msra.mxu0 0
  %110 = vmatprep.subr.bf16.mxu0 0
  %111 = vmatpush1.bf16.msra.mxu0 0
  %112 = vmatprep.subr.bf16.mxu0 0
  %113 = vmatpush1.bf16.msra.mxu0 0
  %114 = vmatprep.subr.bf16.mxu0 0
  %115 = vmatpush1.bf16.msra.mxu0 0
  %116 = vmatprep.subr.bf16.mxu0 0
  %117 = vmatpush1.bf16.msra.mxu0 0
  %118 = vmatprep.mubr.bf16.mxu0 0
  %119 = vmatmul.mubr.bf16.gmra.mrb[0].mxu0 %v63
  %v120 = vpop.f32.mrb[0].mxu0
  %v121 = vadd.f32 %v53, %v120
  %v122 = vpop.f32.mrb[0].mxu0
  %v123 = vpop.f32.mrb[0].mxu0
  %v124 = vadd.f32 %v53, %v123
  %v125 = vpop.f32.mrb[0].mxu0
  %126 = vmatprep.mubr.bf16.mxu0 0
  %127 = vmatmul.mubr.bf16.gmra.mrb[0].mxu0 %v66
  %v128 = vpop.f32.mrb[0].mxu0
  %v129 = vadd.f32 %v53, %v128
  %v130 = vpop.f32.mrb[0].mxu0
  %v131 = vpop.f32.mrb[0].mxu0
  %v132 = vadd.f32 %v53, %v131
  %v133 = vpop.f32.mrb[0].mxu0
  %134 = vmatprep.mubr.bf16.mxu0 0
  %135 = vmatmul.mubr.bf16.gmra.mrb[0].mxu0 %v69
  %v136 = vpop.f32.mrb[0].mxu0
  %v137 = vadd.f32 %v53, %v136
  %v138 = vpop.f32.mrb[0].mxu0
  %v139 = vpop.f32.mrb[0].mxu0
  %v140 = vadd.f32 %v53, %v139
  %v141 = vpop.f32.mrb[0].mxu0
  %142 = vmatprep.mubr.bf16.mxu0 0
  %143 = vmatmul.mubr.bf16.gmra.mrb[0].mxu0 %v72
  %v144 = vpop.f32.mrb[0].mxu0
  %v145 = vadd.f32 %v53, %v144
  %v146 = vpop.f32.mrb[0].mxu0
  %v147 = vpop.f32.mrb[0].mxu0
  %v148 = vadd.f32 %v53, %v147
  %v149 = vpop.f32.mrb[0].mxu0
  %150 = vmatprep.mubr.bf16.mxu0 0
  %151 = vmatmul.mubr.bf16.gmra.mrb[0].mxu0 %v75
  %v152 = vpop.f32.mrb[0].mxu0
  %v153 = vadd.f32 %v53, %v152
  %v154 = vpop.f32.mrb[0].mxu0
  %v155 = vpop.f32.mrb[0].mxu0
  %v156 = vadd.f32 %v53, %v155
  %v157 = vpop.f32.mrb[0].mxu0
  %158 = vmatprep.mubr.bf16.mxu0 0
  %159 = vmatmul.mubr.bf16.gmra.mrb[0].mxu0 %v78
  %v160 = vpop.f32.mrb[0].mxu0
  %v161 = vadd.f32 %v53, %v160
  %v162 = vpop.f32.mrb[0].mxu0
  %v163 = vpop.f32.mrb[0].mxu0
  %v164 = vadd.f32 %v53, %v163
  %v165 = vpop.f32.mrb[0].mxu0
  %166 = vmatprep.mubr.bf16.mxu0 0
  %167 = vmatmul.mubr.bf16.gmra.mrb[0].mxu0 %v81
  %v168 = vpop.f32.mrb[0].mxu0
  %v169 = vadd.f32 %v53, %v168
  %v170 = vpop.f32.mrb[0].mxu0
  %v171 = vpop.f32.mrb[0].mxu0
  %v172 = vadd.f32 %v53, %v171
  %v173 = vpop.f32.mrb[0].mxu0
  %174 = vmatprep.mubr.bf16.mxu0 0
  %175 = vmatmul.mubr.bf16.gmra.mrb[0].mxu0 %v84
  %v176 = vpop.f32.mrb[0].mxu0
  %v177 = vadd.f32 %v53, %v176
  %v178 = vpop.f32.mrb[0].mxu0
  %v179 = vpop.f32.mrb[0].mxu0
  %v180 = vadd.f32 %v53, %v179
  %v181 = vpop.f32.mrb[0].mxu0
  %182 = vdwg.mxu0
  %v183 = vmax.f32 %v121, 0.0
  %v184 = vmax.f32 %v124, 0.0
  %v185 = vmax.f32 %v129, 0.0
  %v186 = vmax.f32 %v132, 0.0
  %v187 = vmax.f32 %v137, 0.0
  %v188 = vmax.f32 %v140, 0.0
  %v189 = vmax.f32 %v145, 0.0
  %v190 = vmax.f32 %v148, 0.0
  %v191 = vmax.f32 %v153, 0.0
  %v192 = vmax.f32 %v156, 0.0
  %v193 = vmax.f32 %v161, 0.0
  %v194 = vmax.f32 %v164, 0.0
  %v195 = vmax.f32 %v169, 0.0
  %v196 = vmax.f32 %v172, 0.0
  %v197 = vmax.f32 %v177, 0.0
  %v198 = vmax.f32 %v180, 0.0
  %v199 = vld [vmem:[%s3] sm:$0xf]
  %v200 = vpack.c.bf16 %v184, %v183
  %v201 = vpack.c.bf16 %v186, %v185
  %v202 = vpack.c.bf16 %v188, %v187
  %v203 = vpack.c.bf16 %v190, %v189
  %v204 = vpack.c.bf16 %v192, %v191
  %v205 = vpack.c.bf16 %v194, %v193
  %v206 = vpack.c.bf16 %v196, %v195
  %v207 = vpack.c.bf16 %v198, %v197
  %208 = vmatprep.subr.bf16.mxu0 0
  %209 = vmatpush1.bf16.xpose.msra.mxu0 %v200
  %210 = vmatprep.subr.bf16.mxu0 0
  %211 = vmatpush1.bf16.xpose.msra.mxu0 %v201
  %212 = vmatprep.subr.bf16.mxu0 0
  %213 = vmatpush1.bf16.xpose.msra.mxu0 %v202
  %214 = vmatprep.subr.bf16.mxu0 0
  %215 = vmatpush1.bf16.xpose.msra.mxu0 %v203
  %216 = vmatprep.subr.bf16.mxu0 0
  %217 = vmatpush1.bf16.xpose.msra.mxu0 %v204
  %218 = vmatprep.subr.bf16.mxu0 0
  %219 = vmatpush1.bf16.xpose.msra.mxu0 %v205
  %220 = vmatprep.subr.bf16.mxu0 0
  %221 = vmatpush1.bf16.xpose.msra.mxu0 %v206
  %222 = vmatprep.subr.bf16.mxu0 0
  %223 = vmatpush1.bf16.xpose.msra.mxu0 %v207
  %224 = vmatprep.subr.bf16.mxu0 0
  %225 = vmatpush1.bf16.xpose.msra.mxu0 0
  %226 = vmatprep.subr.bf16.mxu0 0
  %227 = vmatpush1.bf16.xpose.msra.mxu0 0
  %228 = vmatprep.subr.bf16.mxu0 0
  %229 = vmatpush1.bf16.xpose.msra.mxu0 0
  %230 = vmatprep.subr.bf16.mxu0 0
  %231 = vmatpush1.bf16.xpose.msra.mxu0 0
  %232 = vmatprep.subr.bf16.mxu0 0
  %233 = vmatpush1.bf16.xpose.msra.mxu0 0
  %234 = vmatprep.subr.bf16.mxu0 0
  %235 = vmatpush1.bf16.xpose.msra.mxu0 0
  %236 = vmatprep.subr.bf16.mxu0 0
  %237 = vmatpush1.bf16.xpose.msra.mxu0 0
  %238 = vmatprep.subr.bf16.mxu0 0
  %239 = vmatpush1.bf16.xpose.msra.mxu0 0
  %240 = vmatprep.mubr.bf16.mxu0 0
  %241 = vmatmul.mubr.bf16.gmra.mrb[0].mxu0 %v199
  %v242 = vpop.f32.mrb[0].mxu0
  %v243 = vadd.f32 0.0, %v242
  %v244 = vpop.f32.mrb[0].mxu0
  %v245 = vpop.f32.mrb[0].mxu0
  %v246 = vpop.f32.mrb[0].mxu0
  %247 = vdwg.mxu0
  %s248 = sld [smem:[#allocation2]]
  %v249 = vstv %s248
  %v250 = vadd.f32 %v243, %v249
  %v251 = vmax.f32 %v250, 0.0
  %252 = vst [vmem:[%s5] sm:$0x1] %v251
  // Predicated region
  $region22: #{mlp_regression.1} parent=0 // pred_check
    _
  $region23: #{mlp_regression.1} parent=0 // pred_check_branch
    %254 = sbr.rel (0) target = $region25
  $region24: #{mlp_regression.1} parent=0 // pred_region
    _
  $region25: #{mlp_regression.1} parent=0 // pred_fallthru
    _
  // Predicated region
  $region26: #{mlp_regression.1} parent=0 // pred_check
    _
  $region27: #{mlp_regression.1} parent=0 // pred_check_branch
    %256 = sbr.rel (0) target = $region29
  $region28: #{mlp_regression.1} parent=0 // pred_region
    _
  $region29: #{mlp_regression.1} parent=0 // pred_fallthru
    _

</llo_original>
